<compile_context>
chip_gen: v5e
topology: v5e:2x2
jax: 0.10.0
libtpu: 0.0.40
codegen_flags: <defaults>
</compile_context>

<pallas_src>
import functools

import jax
import jax.numpy as jnp
from jax import lax
from jax.experimental import pallas as pl
from jax.experimental.pallas import tpu as pltpu


def _gaussian_mlp_kernel(x_ref, w0_ref, w1_ref, w2_ref, out_ref, *, output_dim):
    """x_ref: (TB, D_in+1) with trailing ones column; w*_ref bias-augmented."""
    x = x_ref[...]

    # layer 0 (bias via augmented row) + relu; ones pass-through column survives relu
    h = jnp.maximum(
        jnp.dot(x, w0_ref[...], preferred_element_type=jnp.float32), 0.0)
    # layer 1 + relu
    h = jnp.maximum(
        jnp.dot(h, w1_ref[...], preferred_element_type=jnp.float32), 0.0)
    # head (no activation)
    y = jnp.dot(h, w2_ref[...], preferred_element_type=jnp.float32)

    # Numerically stable softplus over the whole tile (EUP work, essentially free),
    # then a single VPU lane-select: low lanes keep mu, high lanes take var.
    sp = jnp.maximum(y, 0.0) + jnp.log1p(jnp.exp(-jnp.abs(y)))
    col = lax.broadcasted_iota(jnp.int32, y.shape, 1)
    out_ref[...] = jnp.where(col < output_dim, y, sp + 1e-6)


def pack_params(params):
    """(w0,b0,w1,b1,w2,b2) with w:(in,out), b:(1,out) -> bias-augmented weights.

    Hidden layers: w_aug = [[w, 0], [b, 1]]  so  [h, 1] @ w_aug = [h@w + b, 1]
    (the ones column passes through relu). Head: w_aug = [[w], [b]].
    """
    w0, b0, w1, b1, w2, b2 = params

    def aug_hidden(w, b):
        top = jnp.concatenate([w, jnp.zeros((w.shape[0], 1), w.dtype)], axis=1)
        bot = jnp.concatenate([b, jnp.ones((1, 1), w.dtype)], axis=1)
        return jnp.concatenate([top, bot], axis=0)

    def aug_final(w, b):
        return jnp.concatenate([w, b], axis=0)

    return aug_hidden(w0, b0), aug_hidden(w1, b1), aug_final(w2, b2)


def gaussian_mlp_forward(x, packed_params, output_dim, *, tb=512):
    """x: (B, D_in) f32. packed_params: bias-augmented (w0a, w1a, w2a)."""
    B, _ = x.shape
    w0a, w1a, w2a = packed_params

    # trailing ones column feeds the bias-augmented layer-0 weights
    x_aug = jnp.concatenate([x, jnp.ones((B, 1), x.dtype)], axis=1)
    d_aug = x_aug.shape[1]
    out_w = 2 * output_dim

    TB = B if B <= tb else tb          # B<=tb: single full block; else 512-row tiles
    grid = (pl.cdiv(B, TB),)

    kernel = functools.partial(_gaussian_mlp_kernel, output_dim=output_dim)

    # Weights: same block every grid step -> stay VMEM-resident across the batch loop.
    resident = lambda a: pl.BlockSpec(a.shape, lambda i: (0,) * a.ndim)

    flops = 2 * B * (w0a.shape[0] * w0a.shape[1]
                     + w1a.shape[0] * w1a.shape[1]
                     + w2a.shape[0] * w2a.shape[1])
    bytes_accessed = (sum(int(a.size) * a.dtype.itemsize
                          for a in (x_aug, w0a, w1a, w2a))
                      + B * out_w * 4)
    cost = pl.CostEstimate(flops=flops,
                           transcendentals=2 * B * output_dim * 2,
                           bytes_accessed=bytes_accessed)

    y = pl.pallas_call(
        kernel,
        out_shape=jax.ShapeDtypeStruct((B, out_w), jnp.float32),
        grid=grid,
        in_specs=[pl.BlockSpec((TB, d_aug), lambda i: (i, 0)),
                  resident(w0a), resident(w1a), resident(w2a)],
        out_specs=pl.BlockSpec((TB, out_w), lambda i: (i, 0)),
        compiler_params=pltpu.CompilerParams(
            dimension_semantics=("parallel",)),
        cost_estimate=cost,
    )(x_aug, w0a, w1a, w2a)

    # free XLA slices (lane-contiguous output slab written once in-kernel)
    return y[:, :output_dim], y[:, output_dim:]


def init_linear(key, fan_in, fan_out):
    """PyTorch nn.Linear default init: U(-1/sqrt(fan_in), 1/sqrt(fan_in))."""
    kw, kb = jax.random.split(key)
    bound = 1.0 / (fan_in ** 0.5)
    w = jax.random.uniform(kw, (fan_in, fan_out), jnp.float32, -bound, bound)
    b = jax.random.uniform(kb, (1, fan_out), jnp.float32, -bound, bound)
    return w, b


def _reference(x, params, output_dim):
    w0, b0, w1, b1, w2, b2 = params
    h = jnp.maximum(x @ w0 + b0, 0.0)
    h = jnp.maximum(h @ w1 + b1, 0.0)
    y = h @ w2 + b2
    return y[:, :output_dim], jax.nn.softplus(y[:, output_dim:]) + 1e-6


if __name__ == "__main__":
    # GaussianMLP(input_dim=16, output_dim=2, hidden_layers=[30, 30], activation='relu')
    input_dim = 16
    output_dim = 2
    hidden_layers = [30, 30]
    batch = 8

    net_structure = [input_dim, *hidden_layers, 2 * output_dim]

    key = jax.random.PRNGKey(0)
    keys = jax.random.split(key, len(net_structure) + 1)

    params = []
    for i in range(len(net_structure) - 1):
        w, b = init_linear(keys[i], net_structure[i], net_structure[i + 1])
        params.extend([w, b])
    params = tuple(params)
    packed = pack_params(params)

    # --- small batch (single grid step) ---
    x = jax.random.normal(keys[-2], (batch, input_dim), jnp.float32)
    mu, var = gaussian_mlp_forward(x, packed, output_dim)
    jax.block_until_ready((mu, var))

    mu_ref, var_ref = _reference(x, params, output_dim)
    assert mu.shape == (batch, output_dim) and var.shape == (batch, output_dim)
    assert jnp.allclose(mu, mu_ref, atol=1e-5), "mu mismatch"
    assert jnp.allclose(var, var_ref, atol=1e-5), "var mismatch"
    assert bool(jnp.all(var > 0.0))

    # --- larger batch exercising the batch grid (2 steps, weights resident) ---
    xb = jax.random.normal(keys[-1], (1024, input_dim), jnp.float32)
    mu_b, var_b = gaussian_mlp_forward(xb, packed, output_dim)
    jax.block_until_ready((mu_b, var_b))
    mu_bref, var_bref = _reference(xb, params, output_dim)
    assert jnp.allclose(mu_b, mu_bref, atol=1e-5), "mu mismatch (batched)"
    assert jnp.allclose(var_b, var_bref, atol=1e-5), "var mismatch (batched)"

    print("KERNEL_OK")
</pallas_src>

<mosaic_0001>
module attributes {stable_mosaic.version = 11 : i64} {
  func.func @_gaussian_mlp_kernel(%arg0: i32, %arg1: memref<8x17xf32, #tpu.memory_space<vmem>>, %arg2: memref<17x31xf32, #tpu.memory_space<vmem>>, %arg3: memref<31x31xf32, #tpu.memory_space<vmem>>, %arg4: memref<31x4xf32, #tpu.memory_space<vmem>>, %arg5: memref<8x4xf32, #tpu.memory_space<vmem>>) attributes {dimension_semantics = [#tpu.dimension_semantics<parallel>], iteration_bounds = array<i64: 1>, scalar_prefetch = 0 : i64, scratch_operands = 0 : i64, tpu.core_type = #tpu.core_type<tc>, window_params = [{transform_indices = @transform_0, window_bounds = array<i64: 8, 17>}, {pipeline_mode = #tpu.pipeline_mode<synchronous>, transform_indices = @transform_1, window_bounds = array<i64: 17, 31>}, {pipeline_mode = #tpu.pipeline_mode<synchronous>, transform_indices = @transform_2, window_bounds = array<i64: 31, 31>}, {pipeline_mode = #tpu.pipeline_mode<synchronous>, transform_indices = @transform_3, window_bounds = array<i64: 31, 4>}, {transform_indices = @transform_4, window_bounds = array<i64: 8, 4>}]} {
    %c0 = arith.constant 0 : index
    %c0_0 = arith.constant 0 : index
    %0 = vector.load %arg1[%c0, %c0_0] : memref<8x17xf32, #tpu.memory_space<vmem>>, vector<8x17xf32>
    %c0_1 = arith.constant 0 : index
    %c0_2 = arith.constant 0 : index
    %1 = vector.load %arg2[%c0_1, %c0_2] : memref<17x31xf32, #tpu.memory_space<vmem>>, vector<17x31xf32>
    %cst = arith.constant dense<0.000000e+00> : vector<8x31xf32>
    %2 = tpu.matmul %0, %1, %cst {dimension_numbers = #tpu.dot_dimension_numbers<[1], [0], [0], [1], [0, 0, 1, 1], [], []>} : vector<8x17xf32>, vector<17x31xf32>, vector<8x31xf32> -> vector<8x31xf32>
    %cst_3 = arith.constant 0.000000e+00 : f32
    %3 = vector.broadcast %cst_3 : f32 to vector<8x31xf32>
    %4 = arith.maximumf %2, %3 : vector<8x31xf32>
    %c0_4 = arith.constant 0 : index
    %c0_5 = arith.constant 0 : index
    %5 = vector.load %arg3[%c0_4, %c0_5] : memref<31x31xf32, #tpu.memory_space<vmem>>, vector<31x31xf32>
    %cst_6 = arith.constant dense<0.000000e+00> : vector<8x31xf32>
    %6 = tpu.matmul %4, %5, %cst_6 {dimension_numbers = #tpu.dot_dimension_numbers<[1], [0], [0], [1], [0, 0, 1, 1], [], []>} : vector<8x31xf32>, vector<31x31xf32>, vector<8x31xf32> -> vector<8x31xf32>
    %cst_7 = arith.constant 0.000000e+00 : f32
    %7 = vector.broadcast %cst_7 : f32 to vector<8x31xf32>
    %8 = arith.maximumf %6, %7 : vector<8x31xf32>
    %c0_8 = arith.constant 0 : index
    %c0_9 = arith.constant 0 : index
    %9 = vector.load %arg4[%c0_8, %c0_9] : memref<31x4xf32, #tpu.memory_space<vmem>>, vector<31x4xf32>
    %cst_10 = arith.constant dense<0.000000e+00> : vector<8x4xf32>
    %10 = tpu.matmul %8, %9, %cst_10 {dimension_numbers = #tpu.dot_dimension_numbers<[1], [0], [0], [1], [0, 0, 1, 1], [], []>} : vector<8x31xf32>, vector<31x4xf32>, vector<8x4xf32> -> vector<8x4xf32>
    %cst_11 = arith.constant 0.000000e+00 : f32
    %11 = vector.broadcast %cst_11 : f32 to vector<8x4xf32>
    %12 = arith.maximumf %10, %11 : vector<8x4xf32>
    %13 = math.absf %10 : vector<8x4xf32>
    %cst_12 = arith.constant 0.000000e+00 : f32
    %14 = vector.broadcast %cst_12 : f32 to vector<8x4xf32>
    %15 = arith.subf %14, %13 : vector<8x4xf32>
    %16 = math.exp %15 : vector<8x4xf32>
    %17 = math.log1p %16 : vector<8x4xf32>
    %18 = arith.addf %12, %17 : vector<8x4xf32>
    %19 = tpu.iota {dimensions = array<i32: 1>} : vector<8x4xi32>
    %c2_i32 = arith.constant 2 : i32
    %20 = vector.broadcast %c2_i32 : i32 to vector<8x4xi32>
    %21 = arith.cmpi slt, %19, %20 : vector<8x4xi32>
    %cst_13 = arith.constant 9.99999997E-7 : f32
    %22 = vector.broadcast %cst_13 : f32 to vector<8x4xf32>
    %23 = arith.addf %18, %22 : vector<8x4xf32>
    %24 = arith.select %21, %10, %23 : vector<8x4xi1>, vector<8x4xf32>
    %c0_14 = arith.constant 0 : index
    %c0_15 = arith.constant 0 : index
    %25 = vector.load %arg5[%c0_14, %c0_15] : memref<8x4xf32, #tpu.memory_space<vmem>>, vector<8x4xf32>
    tpu.vector_store %arg5[%c0_14, %c0_15], %24 {strides = array<i32>} : memref<8x4xf32, #tpu.memory_space<vmem>>, vector<8x4xf32>,
    return
  }
  func.func @transform_0(%arg0: i32) -> (i32, i32) {
    %c0_i32 = arith.constant 0 : i32
    %c0_i32_0 = arith.constant 0 : i32
    return %arg0, %c0_i32 : i32, i32
  }
  func.func @transform_1(%arg0: i32) -> (i32, i32) {
    %c0_i32 = arith.constant 0 : i32
    %c0_i32_0 = arith.constant 0 : i32
    %c0_i32_1 = arith.constant 0 : i32
    return %c0_i32, %c0_i32_0 : i32, i32
  }
  func.func @transform_2(%arg0: i32) -> (i32, i32) {
    %c0_i32 = arith.constant 0 : i32
    %c0_i32_0 = arith.constant 0 : i32
    %c0_i32_1 = arith.constant 0 : i32
    return %c0_i32, %c0_i32_0 : i32, i32
  }
  func.func @transform_3(%arg0: i32) -> (i32, i32) {
    %c0_i32 = arith.constant 0 : i32
    %c0_i32_0 = arith.constant 0 : i32
    %c0_i32_1 = arith.constant 0 : i32
    return %c0_i32, %c0_i32_0 : i32, i32
  }
  func.func @transform_4(%arg0: i32) -> (i32, i32) {
    %c0_i32 = arith.constant 0 : i32
    %c0_i32_0 = arith.constant 0 : i32
    return %arg0, %c0_i32 : i32, i32
  }
}

</mosaic_0001>

<llo_original>
// kernel: tpu_custom_call.1
$region0: #{tpu_custom_call.1}
  #allocation0 [shape = 'u32[]', space=smem, size = 0x4, offset = 0x4, fixed_abs, tag = 'smem constant byte address 0x4 - core index']
  #allocation1 [shape = 'u32[72,128]{1,0:T(1,128)}', space=vmem, size = 0x9000, scoped, tag = 'internal scratch']
  %s0 = inlined_call_operand.hbm [shape: f32[8,17], index: 0, kind: input, shape index: {}]
  %s1 = inlined_call_operand.hbm [shape: f32[17,31], index: 1, kind: input, shape index: {}]
  %s2 = inlined_call_operand.vmem [shape: f32[31,31], index: 2, kind: input, shape index: {}]
  %s3 = inlined_call_operand.vmem [shape: f32[31,4], index: 3, kind: input, shape index: {}]
  %s4 = inlined_call_operand.vmem [shape: f32[8,4], index: 4, kind: output, shape index: {}]
  %s5 = sld [smem:[#allocation0]]
  $region34: #{tpu_custom_call.1} parent=0
    _
  %s7 = ssub.s32 1, %s5
  %s8 = scalar_select 0, %s7, %s5
  $region1: #{tpu_custom_call.1} parent=0
    #allocation2 [shape = 'u8[4096]{0}', space=vmem, size = 0x1000, scoped, tag = 'input window, operand 0, single buffered']
    #allocation3 [shape = 's32[1]{0}', space=sflag, size = 0x4, scoped, tag = 'scoped memory for tpu_custom_call.1']
    #allocation4 [shape = 'u8[12288]{0}', space=vmem, size = 0x3000, scoped, tag = 'input window, operand 1, single buffered']
    #allocation5 [shape = 's32[1]{0}', space=sflag, size = 0x4, scoped, tag = 'scoped memory for tpu_custom_call.1']
    %9 = vsyncpa [#allocation3], 0
    %10 = vsyncpa [#allocation5], 0
    // Predicated region
    $region2: #{tpu_custom_call.1} parent=1 // pred_check
      _
    $region3: #{tpu_custom_call.1} parent=1 // pred_check_branch
      %12 = sbr.rel (0) target = $region5
    $region4: #{tpu_custom_call.1} parent=1 // pred_region
      %14 = vsyncadd [#allocation3], 0
      %s16 = sshll.u32 %s0, 4
      %s17 = int_to_ptr.hbm [resolvable:$true] %s16
      %s18 = sshll.u32 [#allocation2], 4
      %s19 = int_to_ptr.vmem [resolvable:$true] %s18
      %21 = dma.hbm_to_vmem [thread:$0]  %s17, 128, %s19, [#allocation3]
    $region5: #{tpu_custom_call.1} parent=1 // pred_fallthru
      _
    // Predicated region
    $region6: #{tpu_custom_call.1} parent=1 // pred_check
      _
    $region7: #{tpu_custom_call.1} parent=1 // pred_check_branch
      %23 = sbr.rel (0) target = $region9
    $region8: #{tpu_custom_call.1} parent=1 // pred_region
      %25 = vsyncadd [#allocation5], 0
      %s26 = sshll.u32 %s1, 4
      %s27 = int_to_ptr.hbm [resolvable:$true] %s26
      %s28 = sshll.u32 [#allocation4], 4
      %s29 = int_to_ptr.vmem [resolvable:$true] %s28
      %34 = dma.hbm_to_vmem [thread:$0]  %s27, 384, %s29, [#allocation5], 128, 128, 8
    $region9: #{tpu_custom_call.1} parent=1 // pred_fallthru
      _
    // Predicated region
    $region10: #{tpu_custom_call.1} parent=1 // pred_check
      _
    $region11: #{tpu_custom_call.1} parent=1 // pred_check_branch
      %36 = sbr.rel (0) target = $region13
    $region12: #{tpu_custom_call.1} parent=1 // pred_region
      _
    $region13: #{tpu_custom_call.1} parent=1 // pred_fallthru
      _
    // Predicated region
    $region14: #{tpu_custom_call.1} parent=1 // pred_check
      _
    $region15: #{tpu_custom_call.1} parent=1 // pred_check_branch
      %38 = sbr.rel (0) target = $region17
    $region16: #{tpu_custom_call.1} parent=1 // pred_region
      _
    $region17: #{tpu_custom_call.1} parent=1 // pred_fallthru
      _
    // Predicated region
    $region18: #{tpu_custom_call.1} parent=1 // pred_check
      _
    $region19: #{tpu_custom_call.1} parent=1 // pred_check_branch
      %40 = sbr.rel (0) target = $region21
    $region20: #{tpu_custom_call.1} parent=1 // pred_region
      %42 = dma.done [#allocation3], 128
    $region21: #{tpu_custom_call.1} parent=1 // pred_fallthru
      _
    // Predicated region
    $region22: #{tpu_custom_call.1} parent=1 // pred_check
      _
    $region23: #{tpu_custom_call.1} parent=1 // pred_check_branch
      %44 = sbr.rel (0) target = $region25
    $region24: #{tpu_custom_call.1} parent=1 // pred_region
      %46 = dma.done [#allocation5], 384
    $region25: #{tpu_custom_call.1} parent=1 // pred_fallthru
      _
    %v47 = vld [vmem:[#allocation2] sm:$0xff]
    %v48 = vld [vmem:[#allocation4] sm:$0xff]
    %v49 = vld [vmem:[#allocation4 + $0x8] sm:$0xff]
    %v50 = vld [vmem:[#allocation4 + $0x10] sm:$0x1]
    %vm51 = vcmask 138240
    %v53 = vsel %vm51, %v47, 0
    %vm55 = vcmask 1040384
    %v57 = vsel %vm55, %v50, 0
    %59 = vmatpush.msra.mxu0 0.0
    %60 = vmatpush.msra.mxu0 0.0
    %61 = vmatpush.msra.mxu0 0.0
    %62 = vmatpush.msra.mxu0 0.0
    %63 = vmatpush.msra.mxu0 0.0
    %64 = vmatpush.msra.mxu0 0.0
    %65 = vmatpush.msra.mxu0 0.0
    %66 = vmatpush.msra.mxu0 0.0
    %67 = vmatpush.msra.mxu0 0.0
    %68 = vmatpush.msra.mxu0 0.0
    %69 = vmatpush.msra.mxu0 0.0
    %70 = vmatpush.msra.mxu0 0.0
    %71 = vmatpush.msra.mxu0 0.0
    %72 = vmatpush.msra.mxu0 %v57
    %73 = vmatpush.msra.mxu0 %v49
    %74 = vmatpush.msra.mxu0 %v48
    %75 = vmatmul.f32.gmra.mxu0 %v53
    %v76 = vpop.f32.mrf.mxu0
    %v77 = vadd.f32 0.0, %v76
    %78 = vdwg.mxu0
    %v79 = vmax.f32 %v77, 0.0
    %v80 = vld [vmem:[%s2] sm:$0xff]
    %v81 = vld [vmem:[%s2 + $0x8] sm:$0xff]
    %v82 = vld [vmem:[%s2 + $0x10] sm:$0xff]
    %v83 = vld [vmem:[%s2 + $0x18] sm:$0x7f]
    %vm84 = vcmask 252928
    %v86 = vsel %vm84, %v79, 0
    %vm88 = vcmask 1046528
    %v90 = vsel %vm88, %v83, 0
    %92 = vmatpush.msra.mxu0 0.0
    %93 = vmatpush.msra.mxu0 0.0
    %94 = vmatpush.msra.mxu0 0.0
    %95 = vmatpush.msra.mxu0 0.0
    %96 = vmatpush.msra.mxu0 0.0
    %97 = vmatpush.msra.mxu0 0.0
    %98 = vmatpush.msra.mxu0 0.0
    %99 = vmatpush.msra.mxu0 0.0
    %100 = vmatpush.msra.mxu0 0.0
    %101 = vmatpush.msra.mxu0 0.0
    %102 = vmatpush.msra.mxu0 0.0
    %103 = vmatpush.msra.mxu0 0.0
    %104 = vmatpush.msra.mxu0 %v90
    %105 = vmatpush.msra.mxu0 %v82
    %106 = vmatpush.msra.mxu0 %v81
    %107 = vmatpush.msra.mxu0 %v80
    %108 = vmatmul.f32.gmra.mxu0 %v86
    %v109 = vpop.f32.mrf.mxu0
    %v110 = vadd.f32 0.0, %v109
    %111 = vdwg.mxu0
    %v112 = vmax.f32 %v110, 0.0
    %v113 = vld [vmem:[%s3] sm:$0xff]
    %v114 = vld [vmem:[%s3 + $0x8] sm:$0xff]
    %v115 = vld [vmem:[%s3 + $0x10] sm:$0xff]
    %v116 = vld [vmem:[%s3 + $0x18] sm:$0x7f]
    %v118 = vsel %vm84, %v112, 0
    %v121 = vsel %vm88, %v116, 0
    %123 = vmatpush.msra.mxu0 0.0
    %124 = vmatpush.msra.mxu0 0.0
    %125 = vmatpush.msra.mxu0 0.0
    %126 = vmatpush.msra.mxu0 0.0
    %127 = vmatpush.msra.mxu0 0.0
    %128 = vmatpush.msra.mxu0 0.0
    %129 = vmatpush.msra.mxu0 0.0
    %130 = vmatpush.msra.mxu0 0.0
    %131 = vmatpush.msra.mxu0 0.0
    %132 = vmatpush.msra.mxu0 0.0
    %133 = vmatpush.msra.mxu0 0.0
    %134 = vmatpush.msra.mxu0 0.0
    %135 = vmatpush.msra.mxu0 %v121
    %136 = vmatpush.msra.mxu0 %v115
    %137 = vmatpush.msra.mxu0 %v114
    %138 = vmatpush.msra.mxu0 %v113
    %139 = vmatmul.f32.gmra.mxu0 %v118
    %v140 = vpop.f32.mrf.mxu0
    %v141 = vadd.f32 0.0, %v140
    %142 = vdwg.mxu0
    %v143 = vmax.f32 %v141, 0.0
    %v144 = vand.u32 2147483647, %v141
    %v145 = vsub.f32 0.0, %v144
    %v146 = vmul.f32 %v145, 1.442695
    %v147 = vpow.pop %v146
    %v148 = vadd.f32 %v147, 1.0
    %v149 = vlog2.pop %v148
    %v150 = vmul.f32 %v149, 0.6931472
    %v151 = vmul.f32 -0.5, %v147
    %v152 = vadd.f32 %v151, 1.0
    %v153 = vmul.f32 %v152, %v147
    %v154 = vand.u32 2147483647, %v147
    %vm155 = vcmp.lt.f32.partialorder %v154, 0.0004427343
    %v156 = vsel %vm155, %v153, %v150
    %v157 = vadd.f32 %v143, %v156
    %v158 = vlaneseq
    %v159 = vand.u32 %v158, 127
    %vm160 = vcmp.lt.s32.totalorder %v159, 2
    %v161 = vadd.f32 %v157, 1e-06
    %v162 = vsel %vm160, %v141, %v161
    %vm163 = vcmask 31744
    %164 = vst.msk [vmem:[%s4] sm:$0xff] %vm163, %v162
    // Predicated region
    $region26: #{tpu_custom_call.1} parent=1 // pred_check
      _
    $region27: #{tpu_custom_call.1} parent=1 // pred_check_branch
      %166 = sbr.rel (0) target = $region29
    $region28: #{tpu_custom_call.1} parent=1 // pred_region
      _
    $region29: #{tpu_custom_call.1} parent=1 // pred_fallthru
      _
    // Predicated region
    $region30: #{tpu_custom_call.1} parent=1 // pred_check
      _
    $region31: #{tpu_custom_call.1} parent=1 // pred_check_branch
      %168 = sbr.rel (0) target = $region33
    $region32: #{tpu_custom_call.1} parent=1 // pred_region
      _
    $region33: #{tpu_custom_call.1} parent=1 // pred_fallthru
      _
    %169 = vsyncpa [#allocation3], 1
    %170 = vsyncpa [#allocation5], 1

</llo_original>
